<compile_context>
chip_gen: v7x
topology: tpu7x:2x2x1
jax: 0.10.0
libtpu: 0.0.40
codegen_flags: <defaults>
</compile_context>

<pallas_src>
import jax
import jax.numpy as jnp
from jax.experimental import pallas as pl
from jax.experimental.pallas import tpu as pltpu

# ----------------------- model configuration -----------------------
D_IN = 16      # input_output[0]
D_OUT = 8      # input_output[1]
H0 = 32        # layers[0]
H1 = 32        # layers[1]

TM_MAX = 4096  # max batch-tile width (lanes); multiple of 128


def simplenet_kernel(xt_ref, w0_ref, b0_ref, w1_ref, b1_ref, w2_ref, b2_ref, ot_ref):
    """Fused 3-layer MLP on one feature-major batch tile.

    xt_ref : (D_IN, TM) f32      -- x^T tile, batch on lanes
    wK_ref : (out, in)  bf16     -- PyTorch Linear weight layout, resident
    bK_ref : (out, 1)   f32      -- bias column, broadcasts over lanes
    ot_ref : (D_OUT, TM) f32     -- out^T tile (lane-dense writeback)
    """
    xt = xt_ref[...].astype(jnp.bfloat16)                            # (D_IN, TM)

    # Layer 0: Linear(D_IN -> H0), activation Tanh
    h = jnp.dot(w0_ref[...], xt, preferred_element_type=jnp.float32) + b0_ref[...]
    h = jnp.tanh(h)                                                  # (H0, TM) f32

    # Layer 1: Linear(H0 -> H1), activation ReLU
    h = jnp.dot(w1_ref[...], h.astype(jnp.bfloat16),
                preferred_element_type=jnp.float32) + b1_ref[...]
    h = jnp.maximum(h, 0.0)                                          # (H1, TM) f32

    # Layer 2 (output): Linear(H1 -> D_OUT), no activation
    o = jnp.dot(w2_ref[...], h.astype(jnp.bfloat16),
                preferred_element_type=jnp.float32) + b2_ref[...]    # (D_OUT, TM)
    ot_ref[...] = o.astype(ot_ref.dtype)


def _round_up(n, m):
    return ((n + m - 1) // m) * m


def _choose_tm(batch, tm_max=TM_MAX):
    """Pick a batch tile: as large as possible (amortize per-step overhead) while
    keeping >= 2 grid tiles for non-tiny batches (v7x megacore)."""
    bp = _round_up(max(batch, 1), 128)
    if bp <= 256:
        return bp                                   # tiny batch: single tile
    tm = min(tm_max, _round_up(pl.cdiv(bp, 2), 128))
    return max(tm, 128)


def simplenet_forward(x, params, *, tm=None):
    """x: (B, D_IN) float32. params: PyTorch-layout weights wK (out, in) and
    biases bK (out, 1), all float32. Returns (B, D_OUT) float32."""
    B = x.shape[0]
    if tm is None:
        tm = _choose_tm(B)
    num_tiles = pl.cdiv(B, tm)
    Bp = num_tiles * tm

    # Single layout-plumbing pass over x: transpose to feature-major (+ fused
    # zero-pad of the ragged tail). x stays f32; the bf16 cast happens in-kernel.
    xt = jnp.transpose(x)                                            # (D_IN, B)
    if Bp != B:
        xt = jnp.pad(xt, ((0, 0), (0, Bp - B)))

    # Weights are tiny (~2 KB total) -> cast once here; biases stay f32.
    w0 = params["w0"].astype(jnp.bfloat16)
    w1 = params["w1"].astype(jnp.bfloat16)
    w2 = params["w2"].astype(jnp.bfloat16)
    b0, b1, b2 = params["b0"], params["b1"], params["b2"]

    out_t = pl.pallas_call(
        simplenet_kernel,
        out_shape=jax.ShapeDtypeStruct((D_OUT, Bp), jnp.float32),
        grid=(num_tiles,),
        in_specs=[
            pl.BlockSpec((D_IN, tm),   lambda i: (0, i)),   # x^T: tiled along batch (lanes)
            pl.BlockSpec((H0, D_IN),   lambda i: (0, 0)),   # W0: resident
            pl.BlockSpec((H0, 1),      lambda i: (0, 0)),   # b0: resident
            pl.BlockSpec((H1, H0),     lambda i: (0, 0)),   # W1: resident
            pl.BlockSpec((H1, 1),      lambda i: (0, 0)),   # b1: resident
            pl.BlockSpec((D_OUT, H1),  lambda i: (0, 0)),   # W2: resident
            pl.BlockSpec((D_OUT, 1),   lambda i: (0, 0)),   # b2: resident
        ],
        out_specs=pl.BlockSpec((D_OUT, tm), lambda i: (0, i)),  # lane-dense writeback
        compiler_params=pltpu.CompilerParams(
            dimension_semantics=("parallel",)),              # megacore split on v7x
    )(xt, w0, b0, w1, b1, w2, b2)

    return jnp.transpose(out_t[:, :B])                       # (B, D_OUT)


def init_linear(key, fan_in, fan_out):
    """Deterministic init mimicking torch.nn.Linear default (U(-1/sqrt(fan_in), +)).
    Weight in PyTorch layout (fan_out, fan_in); bias shaped (fan_out, 1)."""
    kw, kb = jax.random.split(key)
    bound = 1.0 / jnp.sqrt(jnp.float32(fan_in))
    w = jax.random.uniform(kw, (fan_out, fan_in), jnp.float32, -bound, bound)
    b = jax.random.uniform(kb, (fan_out, 1), jnp.float32, -bound, bound)
    return w, b


def reference_forward(x, params):
    """Pure-JAX reference with the same bf16-operand / f32-accumulate numerics."""
    w0 = params["w0"].astype(jnp.bfloat16)
    w1 = params["w1"].astype(jnp.bfloat16)
    w2 = params["w2"].astype(jnp.bfloat16)
    h = jnp.dot(x.astype(jnp.bfloat16), w0.T,
                preferred_element_type=jnp.float32) + params["b0"].T
    h = jnp.tanh(h)
    h = jnp.dot(h.astype(jnp.bfloat16), w1.T,
                preferred_element_type=jnp.float32) + params["b1"].T
    h = jnp.maximum(h, 0.0)
    return jnp.dot(h.astype(jnp.bfloat16), w2.T,
                   preferred_element_type=jnp.float32) + params["b2"].T


if __name__ == "__main__":
    root = jax.random.PRNGKey(0)
    kx, kx2, k0, k1, k2 = jax.random.split(root, 5)

    w0, b0 = init_linear(k0, D_IN, H0)
    w1, b1 = init_linear(k1, H0, H1)
    w2, b2 = init_linear(k2, H1, D_OUT)
    params = {"w0": w0, "b0": b0, "w1": w1, "b1": b1, "w2": w2, "b2": b2}

    # Small-shape check (B=8 -> one 128-wide tile, padding columns sliced off).
    x_small = jax.random.normal(kx, (8, D_IN), jnp.float32)
    out_small = jax.block_until_ready(simplenet_forward(x_small, params))
    ref_small = reference_forward(x_small, params)
    assert out_small.shape == (8, D_OUT)
    assert jnp.allclose(out_small, ref_small, atol=2e-3, rtol=2e-3)

    # Ragged multi-tile check (B=1000 -> tm=512, 2 grid tiles, 24 padded columns).
    x_big = jax.random.normal(kx2, (1000, D_IN), jnp.float32)
    out_big = jax.block_until_ready(simplenet_forward(x_big, params))
    ref_big = reference_forward(x_big, params)
    assert out_big.shape == (1000, D_OUT)
    assert jnp.allclose(out_big, ref_big, atol=2e-3, rtol=2e-3)

    print("KERNEL_OK")
</pallas_src>

<mosaic_0001>
module attributes {stable_mosaic.version = 11 : i64} {
  func.func @simplenet_kernel(%arg0: i32, %arg1: memref<16x128xf32, #tpu.memory_space<vmem>>, %arg2: memref<32x16xbf16, #tpu.memory_space<vmem>>, %arg3: memref<32x1xf32, #tpu.memory_space<vmem>>, %arg4: memref<32x32xbf16, #tpu.memory_space<vmem>>, %arg5: memref<32x1xf32, #tpu.memory_space<vmem>>, %arg6: memref<8x32xbf16, #tpu.memory_space<vmem>>, %arg7: memref<8x1xf32, #tpu.memory_space<vmem>>, %arg8: memref<8x128xf32, #tpu.memory_space<vmem>>) attributes {dimension_semantics = [#tpu.dimension_semantics<parallel>], iteration_bounds = array<i64: 1>, scalar_prefetch = 0 : i64, scratch_operands = 0 : i64, tpu.core_type = #tpu.core_type<tc>, window_params = [{transform_indices = @transform_0, window_bounds = array<i64: 16, 128>}, {pipeline_mode = #tpu.pipeline_mode<synchronous>, transform_indices = @transform_1, window_bounds = array<i64: 32, 16>}, {pipeline_mode = #tpu.pipeline_mode<synchronous>, transform_indices = @transform_2, window_bounds = array<i64: 32, 1>}, {pipeline_mode = #tpu.pipeline_mode<synchronous>, transform_indices = @transform_3, window_bounds = array<i64: 32, 32>}, {pipeline_mode = #tpu.pipeline_mode<synchronous>, transform_indices = @transform_4, window_bounds = array<i64: 32, 1>}, {pipeline_mode = #tpu.pipeline_mode<synchronous>, transform_indices = @transform_5, window_bounds = array<i64: 8, 32>}, {pipeline_mode = #tpu.pipeline_mode<synchronous>, transform_indices = @transform_6, window_bounds = array<i64: 8, 1>}, {transform_indices = @transform_7, window_bounds = array<i64: 8, 128>}]} {
    %c0 = arith.constant 0 : index
    %c0_0 = arith.constant 0 : index
    %0 = vector.load %arg1[%c0, %c0_0] : memref<16x128xf32, #tpu.memory_space<vmem>>, vector<16x128xf32>
    %1 = arith.truncf %0 : vector<16x128xf32> to vector<16x128xbf16>
    %c0_1 = arith.constant 0 : index
    %c0_2 = arith.constant 0 : index
    %2 = vector.load %arg2[%c0_1, %c0_2] : memref<32x16xbf16, #tpu.memory_space<vmem>>, vector<32x16xbf16>
    %cst = arith.constant dense<0.000000e+00> : vector<32x128xf32>
    %3 = tpu.matmul %2, %1, %cst {dimension_numbers = #tpu.dot_dimension_numbers<[1], [0], [0], [1], [0, 0, 1, 1], [], []>} : vector<32x16xbf16>, vector<16x128xbf16>, vector<32x128xf32> -> vector<32x128xf32>
    %c0_3 = arith.constant 0 : index
    %c0_4 = arith.constant 0 : index
    %4 = vector.load %arg3[%c0_3, %c0_4] : memref<32x1xf32, #tpu.memory_space<vmem>>, vector<32x1xf32>
    %5 = vector.broadcast %4 : vector<32x1xf32> to vector<32x128xf32>
    %6 = arith.addf %3, %5 : vector<32x128xf32>
    %7 = math.tanh %6 : vector<32x128xf32>
    %c0_5 = arith.constant 0 : index
    %c0_6 = arith.constant 0 : index
    %8 = vector.load %arg4[%c0_5, %c0_6] : memref<32x32xbf16, #tpu.memory_space<vmem>>, vector<32x32xbf16>
    %9 = arith.truncf %7 : vector<32x128xf32> to vector<32x128xbf16>
    %cst_7 = arith.constant dense<0.000000e+00> : vector<32x128xf32>
    %10 = tpu.matmul %8, %9, %cst_7 {dimension_numbers = #tpu.dot_dimension_numbers<[1], [0], [0], [1], [0, 0, 1, 1], [], []>} : vector<32x32xbf16>, vector<32x128xbf16>, vector<32x128xf32> -> vector<32x128xf32>
    %c0_8 = arith.constant 0 : index
    %c0_9 = arith.constant 0 : index
    %11 = vector.load %arg5[%c0_8, %c0_9] : memref<32x1xf32, #tpu.memory_space<vmem>>, vector<32x1xf32>
    %12 = vector.broadcast %11 : vector<32x1xf32> to vector<32x128xf32>
    %13 = arith.addf %10, %12 : vector<32x128xf32>
    %cst_10 = arith.constant 0.000000e+00 : f32
    %14 = vector.broadcast %cst_10 : f32 to vector<32x128xf32>
    %15 = arith.maximumf %13, %14 : vector<32x128xf32>
    %c0_11 = arith.constant 0 : index
    %c0_12 = arith.constant 0 : index
    %16 = vector.load %arg6[%c0_11, %c0_12] : memref<8x32xbf16, #tpu.memory_space<vmem>>, vector<8x32xbf16>
    %17 = arith.truncf %15 : vector<32x128xf32> to vector<32x128xbf16>
    %cst_13 = arith.constant dense<0.000000e+00> : vector<8x128xf32>
    %18 = tpu.matmul %16, %17, %cst_13 {dimension_numbers = #tpu.dot_dimension_numbers<[1], [0], [0], [1], [0, 0, 1, 1], [], []>} : vector<8x32xbf16>, vector<32x128xbf16>, vector<8x128xf32> -> vector<8x128xf32>
    %c0_14 = arith.constant 0 : index
    %c0_15 = arith.constant 0 : index
    %19 = vector.load %arg7[%c0_14, %c0_15] : memref<8x1xf32, #tpu.memory_space<vmem>>, vector<8x1xf32>
    %20 = vector.broadcast %19 : vector<8x1xf32> to vector<8x128xf32>
    %21 = arith.addf %18, %20 : vector<8x128xf32>
    %c0_16 = arith.constant 0 : index
    %c0_17 = arith.constant 0 : index
    %22 = vector.load %arg8[%c0_16, %c0_17] : memref<8x128xf32, #tpu.memory_space<vmem>>, vector<8x128xf32>
    tpu.vector_store %arg8[%c0_16, %c0_17], %21 {strides = array<i32>} : memref<8x128xf32, #tpu.memory_space<vmem>>, vector<8x128xf32>,
    return
  }
  func.func @transform_0(%arg0: i32) -> (i32, i32) {
    %c0_i32 = arith.constant 0 : i32
    %c0_i32_0 = arith.constant 0 : i32
    return %c0_i32, %arg0 : i32, i32
  }
  func.func @transform_1(%arg0: i32) -> (i32, i32) {
    %c0_i32 = arith.constant 0 : i32
    %c0_i32_0 = arith.constant 0 : i32
    %c0_i32_1 = arith.constant 0 : i32
    return %c0_i32, %c0_i32_0 : i32, i32
  }
  func.func @transform_2(%arg0: i32) -> (i32, i32) {
    %c0_i32 = arith.constant 0 : i32
    %c0_i32_0 = arith.constant 0 : i32
    %c0_i32_1 = arith.constant 0 : i32
    return %c0_i32, %c0_i32_0 : i32, i32
  }
  func.func @transform_3(%arg0: i32) -> (i32, i32) {
    %c0_i32 = arith.constant 0 : i32
    %c0_i32_0 = arith.constant 0 : i32
    %c0_i32_1 = arith.constant 0 : i32
    return %c0_i32, %c0_i32_0 : i32, i32
  }
  func.func @transform_4(%arg0: i32) -> (i32, i32) {
    %c0_i32 = arith.constant 0 : i32
    %c0_i32_0 = arith.constant 0 : i32
    %c0_i32_1 = arith.constant 0 : i32
    return %c0_i32, %c0_i32_0 : i32, i32
  }
  func.func @transform_5(%arg0: i32) -> (i32, i32) {
    %c0_i32 = arith.constant 0 : i32
    %c0_i32_0 = arith.constant 0 : i32
    %c0_i32_1 = arith.constant 0 : i32
    return %c0_i32, %c0_i32_0 : i32, i32
  }
  func.func @transform_6(%arg0: i32) -> (i32, i32) {
    %c0_i32 = arith.constant 0 : i32
    %c0_i32_0 = arith.constant 0 : i32
    %c0_i32_1 = arith.constant 0 : i32
    return %c0_i32, %c0_i32_0 : i32, i32
  }
  func.func @transform_7(%arg0: i32) -> (i32, i32) {
    %c0_i32 = arith.constant 0 : i32
    %c0_i32_0 = arith.constant 0 : i32
    return %c0_i32, %arg0 : i32, i32
  }
}

</mosaic_0001>

<llo_original>
// kernel: tpu_custom_call.1
$region0: #{tpu_custom_call.1}
  #allocation0 [shape = 'u32[]', space=smem, size = 0x4, offset = 0x4, fixed_abs, tag = 'smem constant byte address 0x4 - core index']
  #allocation1 [shape = 'u32[144,128]{1,0:T(1,128)}', space=vmem, size = 0x12000, scoped, tag = 'internal scratch']
  %s0 = inlined_call_operand.vmem [shape: f32[16,128], index: 0, kind: input, shape index: {}]
  %s1 = inlined_call_operand.vmem [shape: bf16[32,16], index: 1, kind: input, shape index: {}]
  %s2 = inlined_call_operand.vmem [shape: f32[32,1], index: 2, kind: input, shape index: {}]
  %s3 = inlined_call_operand.vmem [shape: bf16[32,32], index: 3, kind: input, shape index: {}]
  %s4 = inlined_call_operand.vmem [shape: f32[32,1], index: 4, kind: input, shape index: {}]
  %s5 = inlined_call_operand.vmem [shape: bf16[8,32], index: 5, kind: input, shape index: {}]
  %s6 = inlined_call_operand.vmem [shape: f32[8,1], index: 6, kind: input, shape index: {}]
  %s7 = inlined_call_operand.hbm [shape: f32[8,128], index: 7, kind: output, shape index: {}]
  %s8 = sld [smem:[#allocation0]]
  $region38: #{tpu_custom_call.1} parent=0
    _
  %s10 = ssub.s32 1, %s8
  %s11 = scalar_select 0, %s10, %s8
  $region1: #{tpu_custom_call.1} parent=0
    #allocation2 [shape = 'u8[4096]{0}', space=vmem, size = 0x1000, scoped, tag = 'output window, operand 0, single buffered']
    #allocation3 [shape = 's32[1]{0}', space=sflag, size = 0x4, scoped, tag = 'scoped memory for tpu_custom_call.1']
    %12 = vsyncpa [#allocation3], 0
    // Predicated region
    $region2: #{tpu_custom_call.1} parent=1 // pred_check
      _
    $region3: #{tpu_custom_call.1} parent=1 // pred_check_branch
      %14 = sbr.rel (0) target = $region5
    $region4: #{tpu_custom_call.1} parent=1 // pred_region
      _
    $region5: #{tpu_custom_call.1} parent=1 // pred_fallthru
      _
    // Predicated region
    $region6: #{tpu_custom_call.1} parent=1 // pred_check
      _
    $region7: #{tpu_custom_call.1} parent=1 // pred_check_branch
      %16 = sbr.rel (0) target = $region9
    $region8: #{tpu_custom_call.1} parent=1 // pred_region
      _
    $region9: #{tpu_custom_call.1} parent=1 // pred_fallthru
      _
    // Predicated region
    $region10: #{tpu_custom_call.1} parent=1 // pred_check
      _
    $region11: #{tpu_custom_call.1} parent=1 // pred_check_branch
      %18 = sbr.rel (0) target = $region13
    $region12: #{tpu_custom_call.1} parent=1 // pred_region
      _
    $region13: #{tpu_custom_call.1} parent=1 // pred_fallthru
      _
    // Predicated region
    $region14: #{tpu_custom_call.1} parent=1 // pred_check
      _
    $region15: #{tpu_custom_call.1} parent=1 // pred_check_branch
      %20 = sbr.rel (0) target = $region17
    $region16: #{tpu_custom_call.1} parent=1 // pred_region
      _
    $region17: #{tpu_custom_call.1} parent=1 // pred_fallthru
      _
    // Predicated region
    $region18: #{tpu_custom_call.1} parent=1 // pred_check
      _
    $region19: #{tpu_custom_call.1} parent=1 // pred_check_branch
      %22 = sbr.rel (0) target = $region21
    $region20: #{tpu_custom_call.1} parent=1 // pred_region
      _
    $region21: #{tpu_custom_call.1} parent=1 // pred_fallthru
      _
    // Predicated region
    $region22: #{tpu_custom_call.1} parent=1 // pred_check
      _
    $region23: #{tpu_custom_call.1} parent=1 // pred_check_branch
      %24 = sbr.rel (0) target = $region25
    $region24: #{tpu_custom_call.1} parent=1 // pred_region
      _
    $region25: #{tpu_custom_call.1} parent=1 // pred_fallthru
      _
    // Predicated region
    $region26: #{tpu_custom_call.1} parent=1 // pred_check
      _
    $region27: #{tpu_custom_call.1} parent=1 // pred_check_branch
      %26 = sbr.rel (0) target = $region29
    $region28: #{tpu_custom_call.1} parent=1 // pred_region
      _
    $region29: #{tpu_custom_call.1} parent=1 // pred_fallthru
      _
    %v28 = vld [vmem:[%s0] sm:$0xff]
    %v29 = vld [vmem:[%s0 + $0x8] sm:$0xff]
    %v30 = vpack.c.bf16 %v29, %v28
    %v31 = vld [vmem:[%s1] sm:$0xf]
    %v32 = vld [vmem:[%s1 + $0x4] sm:$0xf]
    %v33 = vld [vmem:[%s1 + $0x8] sm:$0xf]
    %v34 = vld [vmem:[%s1 + $0xc] sm:$0xf]
    %v35 = vld [vmem:[%s2] sm:$0xff]
    %v36 = vld [vmem:[%s2 + $0x8] sm:$0xff]
    %v37 = vld [vmem:[%s2 + $0x10] sm:$0xff]
    %v38 = vld [vmem:[%s2 + $0x18] sm:$0xff]
    %40 = vset.pattern.permute.xlu0 0
    %41 = vperm.xlu0 %40, %v35
    %v42 = vpop.permute.xlu0 %41
    %45 = vset.pattern.permute.xlu0 0
    %46 = vperm.xlu0 %45, %v36
    %v47 = vpop.permute.xlu0 %46
    %50 = vset.pattern.permute.xlu0 0
    %51 = vperm.xlu0 %50, %v37
    %v52 = vpop.permute.xlu0 %51
    %55 = vset.pattern.permute.xlu0 0
    %56 = vperm.xlu0 %55, %v38
    %v57 = vpop.permute.xlu0 %56
    %v63 = vunpack.c.l.b16 %v31
    %v64 = vunpack.c.l.b16 %v32
    %v65 = vunpack.c.l.b16 %v33
    %v66 = vunpack.c.l.b16 %v34
    %v67 = vpack.c.b16 %v64, %v63
    %v68 = vpack.c.b16 %v66, %v65
    %vm69 = vcmask 130048
    %v71 = vsel %vm69, %v67, 0
    %v74 = vsel %vm69, %v68, 0
    %76 = vmatprep.subr.bf16.mxu0 0
    %77 = vmatpush1.bf16.msra.mxu0 %v30
    %78 = vmatprep.subr.bf16.mxu0 0
    %79 = vmatpush1.bf16.msra.mxu0 0
    %80 = vmatprep.subr.bf16.mxu0 0
    %81 = vmatpush1.bf16.msra.mxu0 0
    %82 = vmatprep.subr.bf16.mxu0 0
    %83 = vmatpush1.bf16.msra.mxu0 0
    %84 = vmatprep.subr.bf16.mxu0 0
    %85 = vmatpush1.bf16.msra.mxu0 0
    %86 = vmatprep.subr.bf16.mxu0 0
    %87 = vmatpush1.bf16.msra.mxu0 0
    %88 = vmatprep.subr.bf16.mxu0 0
    %89 = vmatpush1.bf16.msra.mxu0 0
    %90 = vmatprep.subr.bf16.mxu0 0
    %91 = vmatpush1.bf16.msra.mxu0 0
    %92 = vmatprep.subr.bf16.mxu0 0
    %93 = vmatpush1.bf16.msra.mxu0 0
    %94 = vmatprep.subr.bf16.mxu0 0
    %95 = vmatpush1.bf16.msra.mxu0 0
    %96 = vmatprep.subr.bf16.mxu0 0
    %97 = vmatpush1.bf16.msra.mxu0 0
    %98 = vmatprep.subr.bf16.mxu0 0
    %99 = vmatpush1.bf16.msra.mxu0 0
    %100 = vmatprep.subr.bf16.mxu0 0
    %101 = vmatpush1.bf16.msra.mxu0 0
    %102 = vmatprep.subr.bf16.mxu0 0
    %103 = vmatpush1.bf16.msra.mxu0 0
    %104 = vmatprep.subr.bf16.mxu0 0
    %105 = vmatpush1.bf16.msra.mxu0 0
    %106 = vmatprep.subr.bf16.mxu0 0
    %107 = vmatpush1.bf16.msra.mxu0 0
    %108 = vmatprep.mubr.bf16.mxu0 0
    %109 = vmatmul.mubr.bf16.gmra.mrb[0].mxu0 %v71
    %v110 = vpop.f32.mrb[0].mxu0
    %v111 = vadd.f32 %v42, %v110
    %v112 = vpop.f32.mrb[0].mxu0
    %v113 = vpop.f32.mrb[0].mxu0
    %v114 = vadd.f32 %v47, %v113
    %v115 = vpop.f32.mrb[0].mxu0
    %116 = vmatprep.mubr.bf16.mxu0 0
    %117 = vmatmul.mubr.bf16.gmra.mrb[0].mxu0 %v74
    %v118 = vpop.f32.mrb[0].mxu0
    %v119 = vadd.f32 %v52, %v118
    %v120 = vpop.f32.mrb[0].mxu0
    %v121 = vpop.f32.mrb[0].mxu0
    %v122 = vadd.f32 %v57, %v121
    %v123 = vpop.f32.mrb[0].mxu0
    %124 = vdwg.mxu0
    %v125 = vtanh.pop %v111
    %v126 = vtanh.pop %v114
    %v127 = vtanh.pop %v119
    %v128 = vtanh.pop %v122
    %v129 = vld [vmem:[%s3] sm:$0xf]
    %v130 = vld [vmem:[%s3 + $0x4] sm:$0xf]
    %v131 = vld [vmem:[%s3 + $0x8] sm:$0xf]
    %v132 = vld [vmem:[%s3 + $0xc] sm:$0xf]
    %v133 = vpack.c.bf16 %v126, %v125
    %v134 = vpack.c.bf16 %v128, %v127
    %v135 = vld [vmem:[%s4] sm:$0xff]
    %v136 = vld [vmem:[%s4 + $0x8] sm:$0xff]
    %v137 = vld [vmem:[%s4 + $0x10] sm:$0xff]
    %v138 = vld [vmem:[%s4 + $0x18] sm:$0xff]
    %140 = vset.pattern.permute.xlu0 0
    %141 = vperm.xlu0 %140, %v135
    %v142 = vpop.permute.xlu0 %141
    %145 = vset.pattern.permute.xlu0 0
    %146 = vperm.xlu0 %145, %v136
    %v147 = vpop.permute.xlu0 %146
    %150 = vset.pattern.permute.xlu0 0
    %151 = vperm.xlu0 %150, %v137
    %v152 = vpop.permute.xlu0 %151
    %155 = vset.pattern.permute.xlu0 0
    %156 = vperm.xlu0 %155, %v138
    %v157 = vpop.permute.xlu0 %156
    %v163 = vunpack.c.l.b16 %v129
    %v164 = vunpack.c.l.b16 %v130
    %v165 = vunpack.c.l.b16 %v131
    %v166 = vunpack.c.l.b16 %v132
    %v167 = vpack.c.b16 %v164, %v163
    %v168 = vpack.c.b16 %v166, %v165
    %vm169 = vcmask 261120
    %v171 = vsel %vm169, %v167, 0
    %v174 = vsel %vm169, %v168, 0
    %176 = vmatprep.subr.bf16.mxu0 0
    %177 = vmatpush1.bf16.msra.mxu0 %v133
    %178 = vmatprep.subr.bf16.mxu0 0
    %179 = vmatpush1.bf16.msra.mxu0 %v134
    %180 = vmatprep.subr.bf16.mxu0 0
    %181 = vmatpush1.bf16.msra.mxu0 0
    %182 = vmatprep.subr.bf16.mxu0 0
    %183 = vmatpush1.bf16.msra.mxu0 0
    %184 = vmatprep.subr.bf16.mxu0 0
    %185 = vmatpush1.bf16.msra.mxu0 0
    %186 = vmatprep.subr.bf16.mxu0 0
    %187 = vmatpush1.bf16.msra.mxu0 0
    %188 = vmatprep.subr.bf16.mxu0 0
    %189 = vmatpush1.bf16.msra.mxu0 0
    %190 = vmatprep.subr.bf16.mxu0 0
    %191 = vmatpush1.bf16.msra.mxu0 0
    %192 = vmatprep.subr.bf16.mxu0 0
    %193 = vmatpush1.bf16.msra.mxu0 0
    %194 = vmatprep.subr.bf16.mxu0 0
    %195 = vmatpush1.bf16.msra.mxu0 0
    %196 = vmatprep.subr.bf16.mxu0 0
    %197 = vmatpush1.bf16.msra.mxu0 0
    %198 = vmatprep.subr.bf16.mxu0 0
    %199 = vmatpush1.bf16.msra.mxu0 0
    %200 = vmatprep.subr.bf16.mxu0 0
    %201 = vmatpush1.bf16.msra.mxu0 0
    %202 = vmatprep.subr.bf16.mxu0 0
    %203 = vmatpush1.bf16.msra.mxu0 0
    %204 = vmatprep.subr.bf16.mxu0 0
    %205 = vmatpush1.bf16.msra.mxu0 0
    %206 = vmatprep.subr.bf16.mxu0 0
    %207 = vmatpush1.bf16.msra.mxu0 0
    %208 = vmatprep.mubr.bf16.mxu0 0
    %209 = vmatmul.mubr.bf16.gmra.mrb[0].mxu0 %v171
    %v210 = vpop.f32.mrb[0].mxu0
    %v211 = vadd.f32 %v142, %v210
    %v212 = vpop.f32.mrb[0].mxu0
    %v213 = vpop.f32.mrb[0].mxu0
    %v214 = vadd.f32 %v147, %v213
    %v215 = vpop.f32.mrb[0].mxu0
    %216 = vmatprep.mubr.bf16.mxu0 0
    %217 = vmatmul.mubr.bf16.gmra.mrb[0].mxu0 %v174
    %v218 = vpop.f32.mrb[0].mxu0
    %v219 = vadd.f32 %v152, %v218
    %v220 = vpop.f32.mrb[0].mxu0
    %v221 = vpop.f32.mrb[0].mxu0
    %v222 = vadd.f32 %v157, %v221
    %v223 = vpop.f32.mrb[0].mxu0
    %224 = vdwg.mxu0
    %v225 = vmax.f32 %v211, 0.0
    %v226 = vmax.f32 %v214, 0.0
    %v227 = vmax.f32 %v219, 0.0
    %v228 = vmax.f32 %v222, 0.0
    %v229 = vld [vmem:[%s5] sm:$0xf]
    %v230 = vpack.c.bf16 %v226, %v225
    %v231 = vpack.c.bf16 %v228, %v227
    %v232 = vld [vmem:[%s6] sm:$0xff]
    %234 = vset.pattern.permute.xlu0 0
    %235 = vperm.xlu0 %234, %v232
    %v236 = vpop.permute.xlu0 %235
    %v239 = vsel %vm169, %v229, 0
    %241 = vmatprep.subr.bf16.mxu0 0
    %242 = vmatpush1.bf16.msra.mxu0 %v230
    %243 = vmatprep.subr.bf16.mxu0 0
    %244 = vmatpush1.bf16.msra.mxu0 %v231
    %245 = vmatprep.subr.bf16.mxu0 0
    %246 = vmatpush1.bf16.msra.mxu0 0
    %247 = vmatprep.subr.bf16.mxu0 0
    %248 = vmatpush1.bf16.msra.mxu0 0
    %249 = vmatprep.subr.bf16.mxu0 0
    %250 = vmatpush1.bf16.msra.mxu0 0
    %251 = vmatprep.subr.bf16.mxu0 0
    %252 = vmatpush1.bf16.msra.mxu0 0
    %253 = vmatprep.subr.bf16.mxu0 0
    %254 = vmatpush1.bf16.msra.mxu0 0
    %255 = vmatprep.subr.bf16.mxu0 0
    %256 = vmatpush1.bf16.msra.mxu0 0
    %257 = vmatprep.subr.bf16.mxu0 0
    %258 = vmatpush1.bf16.msra.mxu0 0
    %259 = vmatprep.subr.bf16.mxu0 0
    %260 = vmatpush1.bf16.msra.mxu0 0
    %261 = vmatprep.subr.bf16.mxu0 0
    %262 = vmatpush1.bf16.msra.mxu0 0
    %263 = vmatprep.subr.bf16.mxu0 0
    %264 = vmatpush1.bf16.msra.mxu0 0
    %265 = vmatprep.subr.bf16.mxu0 0
    %266 = vmatpush1.bf16.msra.mxu0 0
    %267 = vmatprep.subr.bf16.mxu0 0
    %268 = vmatpush1.bf16.msra.mxu0 0
    %269 = vmatprep.subr.bf16.mxu0 0
    %270 = vmatpush1.bf16.msra.mxu0 0
    %271 = vmatprep.subr.bf16.mxu0 0
    %272 = vmatpush1.bf16.msra.mxu0 0
    %273 = vmatprep.mubr.bf16.mxu0 0
    %274 = vmatmul.mubr.bf16.gmra.mrb[0].mxu0 %v239
    %v275 = vpop.f32.mrb[0].mxu0
    %v276 = vadd.f32 %v236, %v275
    %v277 = vpop.f32.mrb[0].mxu0
    %v278 = vpop.f32.mrb[0].mxu0
    %v279 = vpop.f32.mrb[0].mxu0
    %280 = vdwg.mxu0
    %281 = vst [vmem:[#allocation2] sm:$0xff] %v276
    // Predicated region
    $region30: #{tpu_custom_call.1} parent=1 // pred_check
      _
    $region31: #{tpu_custom_call.1} parent=1 // pred_check_branch
      %283 = sbr.rel (0) target = $region33
    $region32: #{tpu_custom_call.1} parent=1 // pred_region
      %s285 = ssub.s32 128, 128
      %286 = vsyncadd [#allocation3], %s285
      %s288 = sshll.u32 [#allocation2], 4
      %s289 = int_to_ptr.vmem [resolvable:$true] %s288
      %291 = dma.vmem_to_hbm [thread:$0]  %s289, 128, %s7, [#allocation3]
    $region33: #{tpu_custom_call.1} parent=1 // pred_fallthru
      _
    // Predicated region
    $region34: #{tpu_custom_call.1} parent=1 // pred_check
      _
    $region35: #{tpu_custom_call.1} parent=1 // pred_check_branch
      %293 = sbr.rel (0) target = $region37
    $region36: #{tpu_custom_call.1} parent=1 // pred_region
      %294 = dma.done [#allocation3], 128
    $region37: #{tpu_custom_call.1} parent=1 // pred_fallthru
      _
    %295 = vsyncpa [#allocation3], 1

</llo_original>
